<compile_context>
chip_gen: v7x
topology: tpu7x:2x2x1
jax: 0.10.0
libtpu: 0.0.40
codegen_flags: <defaults>
</compile_context>

<pallas_src>
import functools

import jax
import jax.numpy as jnp
from jax import lax
from jax.experimental import pallas as pl
from jax.experimental.pallas import tpu as pltpu


def _round_up(x, m):
    return (x + m - 1) // m * m


def _vq_kernel(n_valid, x_ref, e_ref, e2_ref, q_ref, idx_ref, counts_ref, sse_ref):
    i = pl.program_id(0)
    x = x_ref[...]                      # (TILE_N, D_pad) f32
    e = e_ref[...]                      # (K_pad, D_pad)  f32, VMEM-resident
    e2 = e2_ref[...]                    # (1, K_pad)      f32, padded cols = 1e30
    tn, _ = x.shape
    kp = e.shape[0]

    # Argmin distance.  ||x||^2 is constant per row, so
    # argmin_k(||x-e_k||^2) == argmin_k(||e_k||^2 - 2 x.e_k): drop the per-row
    # norm (saves an XLU reduce + (N,K) broadcast-add per tile).
    # Contract on the last dim of both operands (no materialized transpose).
    dots = lax.dot_general(
        x, e, (((1,), (1,)), ((), ())), preferred_element_type=jnp.float32
    )                                    # (TILE_N, K_pad)
    dist = e2 - 2.0 * dots

    # First-occurrence argmin (matches torch.argmin tie-breaking).
    min_d = jnp.min(dist, axis=1, keepdims=True)
    col = lax.broadcasted_iota(jnp.int32, (tn, kp), 1)
    idx = jnp.min(jnp.where(dist == min_d, col, kp), axis=1)       # (TILE_N,) i32

    # One-hot selection.
    # TODO(synk): replace the one-hot matmul with a VMEM row gather of the
    # codebook once lax.gather/jnp.take lowering covers this pattern; the
    # matmul doubles MXU work but is the portable, guaranteed lowering.
    enc = (col == idx[:, None]).astype(jnp.float32)                # (TILE_N, K_pad)
    q = jnp.dot(enc, e, preferred_element_type=jnp.float32)        # (TILE_N, D_pad)

    # Mask padding rows (beyond the true N) out of the reductions.
    row = i * tn + lax.broadcasted_iota(jnp.int32, (tn, 1), 0)     # (TILE_N, 1)
    valid = (row < n_valid).astype(jnp.float32)

    q_ref[...] = q
    idx_ref[...] = idx[None, None, :]                              # lane-dense store
    counts_ref[...] = jnp.sum(enc * valid, axis=0, keepdims=True)[None]
    diff = (q - x) * valid
    sse_ref[...] = jnp.sum(diff * diff).reshape(1, 1, 1)


def vector_quantizer(inputs, codebook, commitment_cost=0.25):
    """Forward pass of VectorQuantizer.

    inputs:   (B, embedding_dim, L)  float32   (PyTorch NCW layout)
    codebook: (num_embeddings, embedding_dim)  float32
    Returns (quantized (B, L, D), loss, perplexity, indices (B*L, 1) int32).
    """
    B, D, L = inputs.shape
    K, Dc = codebook.shape
    assert D == Dc
    x_flat = jnp.transpose(inputs, (0, 2, 1)).reshape(-1, D)       # (N, D)
    N = x_flat.shape[0]

    # Lane/tile padding: D and K to multiples of 128, N to a multiple of TILE_N.
    D_pad = _round_up(D, 128)
    K_pad = _round_up(K, 128)
    tile_n = 512
    # Keep the (TILE_N, K_pad) distance/one-hot intermediates + tiles modest so
    # the per-tile budget also fits v7x's smaller (64 MiB physical) VMEM.
    while tile_n > 128 and (tile_n * K_pad * 8 + tile_n * D_pad * 16) > (16 << 20):
        tile_n //= 2
    TILE_N = min(tile_n, _round_up(N, 128))
    N_pad = _round_up(N, TILE_N)
    num_tiles = N_pad // TILE_N

    x_p = jnp.zeros((N_pad, D_pad), jnp.float32).at[:N, :D].set(x_flat)
    e_p = jnp.zeros((K_pad, D_pad), jnp.float32).at[:K, :D].set(codebook)
    # Codebook squared norms hoisted out of the kernel (computed once, not per
    # tile); padded codes get a huge norm so they can never win the argmin.
    e2 = jnp.sum(codebook.astype(jnp.float32) ** 2, axis=1)
    e2_p = jnp.full((1, K_pad), 1e30, jnp.float32).at[0, :K].set(e2)

    flops = 2 * 2 * N_pad * K_pad * D_pad                 # distance + one-hot matmuls
    bytes_accessed = 4 * (2 * N_pad * D_pad + K_pad * (D_pad + 1)
                          + N_pad + num_tiles * (K_pad + 1))
    vmem_bytes = (4 * TILE_N * D_pad * 4                  # x, q (double-buffered)
                  + 2 * K_pad * D_pad * 4                 # resident codebook
                  + 2 * TILE_N * K_pad * 4                # dist + one-hot temps
                  + 8 * (TILE_N + K_pad))
    vmem_limit = int(min(48 << 20, max(16 << 20, 2 * vmem_bytes)))

    q_p, idx_p, counts_p, sse_p = pl.pallas_call(
        functools.partial(_vq_kernel, N),
        grid=(num_tiles,),
        in_specs=[
            pl.BlockSpec((TILE_N, D_pad), lambda i: (i, 0)),       # x tile
            pl.BlockSpec((K_pad, D_pad), lambda i: (0, 0)),        # codebook (resident)
            pl.BlockSpec((1, K_pad), lambda i: (0, 0)),            # ||e||^2
        ],
        out_specs=(
            pl.BlockSpec((TILE_N, D_pad), lambda i: (i, 0)),       # quantized
            pl.BlockSpec((1, 1, TILE_N), lambda i: (i, 0, 0)),     # indices (lane-dense)
            pl.BlockSpec((1, 1, K_pad), lambda i: (i, 0, 0)),      # per-tile counts
            pl.BlockSpec((1, 1, 1), lambda i: (i, 0, 0)),          # per-tile SSE
        ),
        out_shape=(
            jax.ShapeDtypeStruct((N_pad, D_pad), jnp.float32),
            jax.ShapeDtypeStruct((num_tiles, 1, TILE_N), jnp.int32),
            jax.ShapeDtypeStruct((num_tiles, 1, K_pad), jnp.float32),
            jax.ShapeDtypeStruct((num_tiles, 1, 1), jnp.float32),
        ),
        compiler_params=pltpu.CompilerParams(
            dimension_semantics=("parallel",),
            vmem_limit_bytes=vmem_limit,
        ),
        cost_estimate=pl.CostEstimate(
            flops=flops, transcendentals=0, bytes_accessed=bytes_accessed
        ),
    )(x_p, e_p, e2_p)

    q = q_p[:N, :D]
    idx = idx_p.reshape(-1)[:N].reshape(N, 1)
    counts = jnp.sum(counts_p.reshape(num_tiles, K_pad)[:, :K], axis=0)   # (K,)
    sse = jnp.sum(sse_p)

    # Losses: in the forward pass detach() does not change values, so
    # q_latent_loss == e_latent_loss == mse(quantized, inputs).
    mse = sse / jnp.float32(N * D)
    loss = mse + commitment_cost * mse

    # Straight-through estimator: forward value of quantized is unchanged.
    quantized = q.reshape(B, L, D)

    avg_probs = counts / jnp.float32(N)
    perplexity = jnp.exp(-jnp.sum(avg_probs * jnp.log(avg_probs + 1e-10)))

    # TODO(synk): PyTorch returns int64 indices; int32 used here (x64 disabled by default).
    return quantized, loss, perplexity, idx


if __name__ == "__main__":
    B, D, L = 2, 32, 16           # batch, embedding_dim (channels), sequence length
    K = 64                        # num_embeddings
    commitment_cost = 0.25

    key = jax.random.PRNGKey(0)
    k_in, k_emb = jax.random.split(key)
    inputs = jax.random.normal(k_in, (B, D, L), dtype=jnp.float32)
    # nn.Embedding(K, D).weight.data.uniform_(-1/K, 1/K)
    codebook = jax.random.uniform(
        k_emb, (K, D), dtype=jnp.float32, minval=-1.0 / K, maxval=1.0 / K
    )

    quantized, loss, perplexity, indices = vector_quantizer(
        inputs, codebook, commitment_cost
    )
    jax.block_until_ready((quantized, loss, perplexity, indices))

    assert quantized.shape == (B, L, D)
    assert indices.shape == (B * L, 1)
    assert bool(jnp.isfinite(loss)) and bool(jnp.isfinite(perplexity))
    print("KERNEL_OK")
</pallas_src>

<mosaic_0001>
module attributes {stable_mosaic.version = 11 : i64} {
  func.func @_vq_kernel(%arg0: i32, %arg1: memref<128x128xf32, #tpu.memory_space<vmem>>, %arg2: memref<128x128xf32, #tpu.memory_space<vmem>>, %arg3: memref<1x128xf32, #tpu.memory_space<vmem>>, %arg4: memref<128x128xf32, #tpu.memory_space<vmem>>, %arg5: memref<1x1x128xi32, #tpu.memory_space<vmem>>, %arg6: memref<1x1x128xf32, #tpu.memory_space<vmem>>, %arg7: memref<1x1x1xf32, #tpu.memory_space<vmem>>) attributes {dimension_semantics = [#tpu.dimension_semantics<parallel>], iteration_bounds = array<i64: 1>, scalar_prefetch = 0 : i64, scratch_operands = 0 : i64, tpu.core_type = #tpu.core_type<tc>, window_params = [{transform_indices = @transform_0, window_bounds = array<i64: 128, 128>}, {pipeline_mode = #tpu.pipeline_mode<synchronous>, transform_indices = @transform_1, window_bounds = array<i64: 128, 128>}, {pipeline_mode = #tpu.pipeline_mode<synchronous>, transform_indices = @transform_2, window_bounds = array<i64: 1, 128>}, {transform_indices = @transform_3, window_bounds = array<i64: 128, 128>}, {transform_indices = @transform_4, window_bounds = array<i64: 1, 1, 128>}, {transform_indices = @transform_5, window_bounds = array<i64: 1, 1, 128>}, {transform_indices = @transform_6, window_bounds = array<i64: 1, 1, 1>}]} {
    %c0 = arith.constant 0 : index
    %c0_0 = arith.constant 0 : index
    %0 = vector.load %arg1[%c0, %c0_0] : memref<128x128xf32, #tpu.memory_space<vmem>>, vector<128x128xf32>
    %c0_1 = arith.constant 0 : index
    %c0_2 = arith.constant 0 : index
    %1 = vector.load %arg2[%c0_1, %c0_2] : memref<128x128xf32, #tpu.memory_space<vmem>>, vector<128x128xf32>
    %c0_3 = arith.constant 0 : index
    %c0_4 = arith.constant 0 : index
    %2 = vector.load %arg3[%c0_3, %c0_4] : memref<1x128xf32, #tpu.memory_space<vmem>>, vector<1x128xf32>
    %cst = arith.constant dense<0.000000e+00> : vector<128x128xf32>
    %3 = tpu.matmul %0, %1, %cst {dimension_numbers = #tpu.dot_dimension_numbers<[1], [1], [0], [0], [0, 0, 1, 0], [], []>} : vector<128x128xf32>, vector<128x128xf32>, vector<128x128xf32> -> vector<128x128xf32>
    %cst_5 = arith.constant 2.000000e+00 : f32
    %4 = vector.broadcast %cst_5 : f32 to vector<128x128xf32>
    %5 = arith.mulf %4, %3 : vector<128x128xf32>
    %6 = vector.broadcast %2 : vector<1x128xf32> to vector<128x128xf32>
    %7 = arith.subf %6, %5 : vector<128x128xf32>
    %cst_6 = arith.constant dense<0x7F800000> : vector<128xf32>
    %8 = vector.multi_reduction <minimumf>, %7, %cst_6 [1] : vector<128x128xf32> to vector<128xf32>
    %9 = vector.shape_cast %8 : vector<128xf32> to vector<128x1xf32>
    %10 = tpu.iota {dimensions = array<i32: 1>} : vector<128x128xi32>
    %11 = vector.broadcast %9 : vector<128x1xf32> to vector<128x128xf32>
    %12 = arith.cmpf oeq, %7, %11 : vector<128x128xf32>
    %c128_i32 = arith.constant 128 : i32
    %13 = vector.broadcast %c128_i32 : i32 to vector<128x128xi32>
    %14 = arith.select %12, %10, %13 : vector<128x128xi1>, vector<128x128xi32>
    %cst_7 = arith.constant dense<2147483647> : vector<128xi32>
    %15 = vector.multi_reduction <minsi>, %14, %cst_7 [1] : vector<128x128xi32> to vector<128xi32>
    %16 = vector.shape_cast %15 : vector<128xi32> to vector<128x1xi32>
    %17 = vector.broadcast %16 : vector<128x1xi32> to vector<128x128xi32>
    %18 = arith.cmpi eq, %10, %17 : vector<128x128xi32>
    %19 = arith.extui %18 : vector<128x128xi1> to vector<128x128xi32>
    %20 = arith.sitofp %19 : vector<128x128xi32> to vector<128x128xf32>
    %cst_8 = arith.constant dense<0.000000e+00> : vector<128x128xf32>
    %21 = tpu.matmul %20, %1, %cst_8 {dimension_numbers = #tpu.dot_dimension_numbers<[1], [0], [0], [1], [0, 0, 1, 1], [], []>} : vector<128x128xf32>, vector<128x128xf32>, vector<128x128xf32> -> vector<128x128xf32>
    %c128_i32_9 = arith.constant 128 : i32
    %22 = arith.muli %arg0, %c128_i32_9 : i32
    %23 = tpu.iota {dimensions = array<i32: 0>} : vector<128x1xi32>
    %24 = vector.broadcast %22 : i32 to vector<128x1xi32>
    %25 = arith.addi %24, %23 : vector<128x1xi32>
    %c32_i32 = arith.constant 32 : i32
    %26 = vector.broadcast %c32_i32 : i32 to vector<128x1xi32>
    %27 = arith.cmpi slt, %25, %26 : vector<128x1xi32>
    %28 = arith.extui %27 : vector<128x1xi1> to vector<128x1xi32>
    %29 = arith.sitofp %28 : vector<128x1xi32> to vector<128x1xf32>
    %c0_10 = arith.constant 0 : index
    %c0_11 = arith.constant 0 : index
    %30 = vector.load %arg4[%c0_10, %c0_11] : memref<128x128xf32, #tpu.memory_space<vmem>>, vector<128x128xf32>
    tpu.vector_store %arg4[%c0_10, %c0_11], %21 {strides = array<i32>} : memref<128x128xf32, #tpu.memory_space<vmem>>, vector<128x128xf32>,
    %31 = vector.shape_cast %15 : vector<128xi32> to vector<1x1x128xi32>
    %c0_12 = arith.constant 0 : index
    %c0_13 = arith.constant 0 : index
    %c0_14 = arith.constant 0 : index
    %32 = vector.load %arg5[%c0_12, %c0_13, %c0_14] : memref<1x1x128xi32, #tpu.memory_space<vmem>>, vector<1x1x128xi32>
    tpu.vector_store %arg5[%c0_12, %c0_13, %c0_14], %31 {strides = array<i32>} : memref<1x1x128xi32, #tpu.memory_space<vmem>>, vector<1x1x128xi32>,
    %33 = vector.broadcast %29 : vector<128x1xf32> to vector<128x128xf32>
    %34 = arith.mulf %20, %33 : vector<128x128xf32>
    %cst_15 = arith.constant dense<0.000000e+00> : vector<128xf32>
    %35 = vector.multi_reduction <add>, %34, %cst_15 [0] : vector<128x128xf32> to vector<128xf32>
    %36 = vector.shape_cast %35 : vector<128xf32> to vector<1x128xf32>
    %37 = vector.shape_cast %36 : vector<1x128xf32> to vector<1x1x128xf32>
    %c0_16 = arith.constant 0 : index
    %c0_17 = arith.constant 0 : index
    %c0_18 = arith.constant 0 : index
    %38 = vector.load %arg6[%c0_16, %c0_17, %c0_18] : memref<1x1x128xf32, #tpu.memory_space<vmem>>, vector<1x1x128xf32>
    tpu.vector_store %arg6[%c0_16, %c0_17, %c0_18], %37 {strides = array<i32>} : memref<1x1x128xf32, #tpu.memory_space<vmem>>, vector<1x1x128xf32>,
    %39 = arith.subf %21, %0 : vector<128x128xf32>
    %40 = vector.broadcast %29 : vector<128x1xf32> to vector<128x128xf32>
    %41 = arith.mulf %39, %40 : vector<128x128xf32>
    %42 = arith.mulf %41, %41 : vector<128x128xf32>
    %43 = vector.shape_cast %42 : vector<128x128xf32> to vector<1x128x128xf32>
    %cst_19 = arith.constant dense<0.000000e+00> : vector<1xf32>
    %44 = vector.multi_reduction <add>, %43, %cst_19 [1, 2] : vector<1x128x128xf32> to vector<1xf32>
    %45 = vector.shape_cast %44 : vector<1xf32> to vector<1x1x1xf32>
    %46 = vector.extract %45[0, 0, 0] : f32 from vector<1x1x1xf32>
    %47 = vector.broadcast %46 : f32 to vector<1x1x1xf32>
    %c0_20 = arith.constant 0 : index
    %c0_21 = arith.constant 0 : index
    %c0_22 = arith.constant 0 : index
    %48 = vector.load %arg7[%c0_20, %c0_21, %c0_22] : memref<1x1x1xf32, #tpu.memory_space<vmem>>, vector<1x1x1xf32>
    tpu.vector_store %arg7[%c0_20, %c0_21, %c0_22], %47 {strides = array<i32>} : memref<1x1x1xf32, #tpu.memory_space<vmem>>, vector<1x1x1xf32>,
    return
  }
  func.func @transform_0(%arg0: i32) -> (i32, i32) {
    %c0_i32 = arith.constant 0 : i32
    %c0_i32_0 = arith.constant 0 : i32
    return %arg0, %c0_i32 : i32, i32
  }
  func.func @transform_1(%arg0: i32) -> (i32, i32) {
    %c0_i32 = arith.constant 0 : i32
    %c0_i32_0 = arith.constant 0 : i32
    %c0_i32_1 = arith.constant 0 : i32
    return %c0_i32, %c0_i32_0 : i32, i32
  }
  func.func @transform_2(%arg0: i32) -> (i32, i32) {
    %c0_i32 = arith.constant 0 : i32
    %c0_i32_0 = arith.constant 0 : i32
    %c0_i32_1 = arith.constant 0 : i32
    return %c0_i32, %c0_i32_0 : i32, i32
  }
  func.func @transform_3(%arg0: i32) -> (i32, i32) {
    %c0_i32 = arith.constant 0 : i32
    %c0_i32_0 = arith.constant 0 : i32
    return %arg0, %c0_i32 : i32, i32
  }
  func.func @transform_4(%arg0: i32) -> (i32, i32, i32) {
    %c0_i32 = arith.constant 0 : i32
    %c0_i32_0 = arith.constant 0 : i32
    %c0_i32_1 = arith.constant 0 : i32
    return %arg0, %c0_i32, %c0_i32_0 : i32, i32, i32
  }
  func.func @transform_5(%arg0: i32) -> (i32, i32, i32) {
    %c0_i32 = arith.constant 0 : i32
    %c0_i32_0 = arith.constant 0 : i32
    %c0_i32_1 = arith.constant 0 : i32
    return %arg0, %c0_i32, %c0_i32_0 : i32, i32, i32
  }
  func.func @transform_6(%arg0: i32) -> (i32, i32, i32) {
    %c0_i32 = arith.constant 0 : i32
    %c0_i32_0 = arith.constant 0 : i32
    %c0_i32_1 = arith.constant 0 : i32
    return %arg0, %c0_i32, %c0_i32_0 : i32, i32, i32
  }
}

</mosaic_0001>

<llo_original>
// kernel: tpu_custom_call.1
$region0: #{tpu_custom_call.1}
  #allocation0 [shape = 'u32[]', space=smem, size = 0x4, offset = 0x4, fixed_abs, tag = 'smem constant byte address 0x4 - core index']
  #allocation1 [shape = 'u32[144,128]{1,0:T(1,128)}', space=vmem, size = 0x12000, scoped, tag = 'internal scratch']
  %s0 = inlined_call_operand.hbm [shape: f32[128,128], index: 0, kind: input, shape index: {}]
  %s1 = inlined_call_operand.hbm [shape: f32[128,128], index: 1, kind: input, shape index: {}]
  %s2 = inlined_call_operand.vmem [shape: f32[1,128], index: 2, kind: input, shape index: {}]
  %s3 = inlined_call_operand.hbm [shape: f32[128,128], index: 3, kind: output, shape index: {0}]
  %s4 = inlined_call_operand.hbm [shape: s32[1,1,128], index: 4, kind: output, shape index: {1}]
  %s5 = inlined_call_operand.hbm [shape: f32[1,1,128], index: 5, kind: output, shape index: {2}]
  %s6 = inlined_call_operand.hbm [shape: f32[1,1,1], index: 6, kind: output, shape index: {3}]
  %7 = xla_tuple %s3, %s4, %s5, %s6
  %s8 = sld [smem:[#allocation0]]
  $region54: #{tpu_custom_call.1} parent=0
    _
  %s10 = ssub.s32 1, %s8
  %s11 = scalar_select 0, %s10, %s8
  $region1: #{tpu_custom_call.1} parent=0
    #allocation2 [shape = 'u8[65536]{0}', space=vmem, size = 0x10000, scoped, tag = 'input window, operand 0, single buffered']
    #allocation3 [shape = 's32[1]{0}', space=sflag, size = 0x4, scoped, tag = 'scoped memory for tpu_custom_call.1']
    #allocation4 [shape = 's32[1]{0}', space=sflag, size = 0x4, scoped, tag = 'scoped memory for tpu_custom_call.1']
    #allocation5 [shape = 'u8[65536]{0}', space=vmem, size = 0x10000, scoped, tag = 'input window, operand 1, single buffered']
    #allocation6 [shape = 's32[1]{0}', space=sflag, size = 0x4, scoped, tag = 'scoped memory for tpu_custom_call.1']
    #allocation7 [shape = 'u8[65536]{0}', space=vmem, size = 0x10000, scoped, tag = 'output window, operand 0, single buffered']
    #allocation8 [shape = 'u8[512]{0}', space=vmem, size = 0x400, scoped, tag = 'output window, operand 1, single buffered']
    #allocation9 [shape = 's32[1]{0}', space=sflag, size = 0x4, scoped, tag = 'scoped memory for tpu_custom_call.1']
    #allocation10 [shape = 'u8[512]{0}', space=vmem, size = 0x400, scoped, tag = 'output window, operand 2, single buffered']
    #allocation11 [shape = 'u8[512]{0}', space=vmem, size = 0x400, scoped, tag = 'output window, operand 3, single buffered']
    #allocation12 [shape = 's32[1]{0}', space=sflag, size = 0x4, scoped, tag = 'scoped memory for tpu_custom_call.1']
    %12 = vsyncpa [#allocation3], 0
    %13 = vsyncpa [#allocation6], 0
    %14 = vsyncpa [#allocation4], 0
    %15 = vsyncpa [#allocation9], 0
    %16 = vsyncpa [#allocation12], 0
    // Predicated region
    $region2: #{tpu_custom_call.1} parent=1 // pred_check
      _
    $region3: #{tpu_custom_call.1} parent=1 // pred_check_branch
      %18 = sbr.rel (0) target = $region5
    $region4: #{tpu_custom_call.1} parent=1 // pred_region
      %s20 = ssub.s32 2048, 2048
      %21 = vsyncadd [#allocation3], %s20
      %s22 = sshll.u32 [#allocation2], 4
      %s23 = int_to_ptr.vmem [resolvable:$true] %s22
      %28 = dma.hbm_to_vmem [thread:$0]  %s0, 2048, %s23, [#allocation3], 128, 128, 8
    $region5: #{tpu_custom_call.1} parent=1 // pred_fallthru
      _
    // Predicated region
    $region6: #{tpu_custom_call.1} parent=1 // pred_check
      _
    $region7: #{tpu_custom_call.1} parent=1 // pred_check_branch
      %30 = sbr.rel (0) target = $region9
    $region8: #{tpu_custom_call.1} parent=1 // pred_region
      %s32 = ssub.s32 2048, 2048
      %33 = vsyncadd [#allocation6], %s32
      %s34 = sshll.u32 [#allocation5], 4
      %s35 = int_to_ptr.vmem [resolvable:$true] %s34
      %40 = dma.hbm_to_vmem [thread:$0]  %s1, 2048, %s35, [#allocation6], 128, 128, 8
    $region9: #{tpu_custom_call.1} parent=1 // pred_fallthru
      _
    // Predicated region
    $region10: #{tpu_custom_call.1} parent=1 // pred_check
      _
    $region11: #{tpu_custom_call.1} parent=1 // pred_check_branch
      %42 = sbr.rel (0) target = $region13
    $region12: #{tpu_custom_call.1} parent=1 // pred_region
      _
    $region13: #{tpu_custom_call.1} parent=1 // pred_fallthru
      _
    // Predicated region
    $region14: #{tpu_custom_call.1} parent=1 // pred_check
      _
    $region15: #{tpu_custom_call.1} parent=1 // pred_check_branch
      %44 = sbr.rel (0) target = $region17
    $region16: #{tpu_custom_call.1} parent=1 // pred_region
      %45 = dma.done [#allocation3], 2048
    $region17: #{tpu_custom_call.1} parent=1 // pred_fallthru
      _
    // Predicated region
    $region18: #{tpu_custom_call.1} parent=1 // pred_check
      _
    $region19: #{tpu_custom_call.1} parent=1 // pred_check_branch
      %47 = sbr.rel (0) target = $region21
    $region20: #{tpu_custom_call.1} parent=1 // pred_region
      %48 = dma.done [#allocation6], 2048
    $region21: #{tpu_custom_call.1} parent=1 // pred_fallthru
      _
    %v49 = vld [vmem:[#allocation2] sm:$0xff]
    %v50 = vld [vmem:[#allocation2 + $0x8] sm:$0xff]
    %v51 = vld [vmem:[#allocation2 + $0x10] sm:$0xff]
    %v52 = vld [vmem:[#allocation2 + $0x18] sm:$0xff]
    %v53 = vld [vmem:[#allocation2 + $0x20] sm:$0xff]
    %v54 = vld [vmem:[#allocation2 + $0x28] sm:$0xff]
    %v55 = vld [vmem:[#allocation2 + $0x30] sm:$0xff]
    %v56 = vld [vmem:[#allocation2 + $0x38] sm:$0xff]
    %v57 = vld [vmem:[#allocation2 + $0x40] sm:$0xff]
    %v58 = vld [vmem:[#allocation2 + $0x48] sm:$0xff]
    %v59 = vld [vmem:[#allocation2 + $0x50] sm:$0xff]
    %v60 = vld [vmem:[#allocation2 + $0x58] sm:$0xff]
    %v61 = vld [vmem:[#allocation2 + $0x60] sm:$0xff]
    %v62 = vld [vmem:[#allocation2 + $0x68] sm:$0xff]
    %v63 = vld [vmem:[#allocation2 + $0x70] sm:$0xff]
    %v64 = vld [vmem:[#allocation2 + $0x78] sm:$0xff]
    %v65 = vld [vmem:[#allocation5] sm:$0xff]
    %v66 = vld [vmem:[#allocation5 + $0x8] sm:$0xff]
    %v67 = vld [vmem:[#allocation5 + $0x10] sm:$0xff]
    %v68 = vld [vmem:[#allocation5 + $0x18] sm:$0xff]
    %v69 = vld [vmem:[#allocation5 + $0x20] sm:$0xff]
    %v70 = vld [vmem:[#allocation5 + $0x28] sm:$0xff]
    %v71 = vld [vmem:[#allocation5 + $0x30] sm:$0xff]
    %v72 = vld [vmem:[#allocation5 + $0x38] sm:$0xff]
    %v73 = vld [vmem:[#allocation5 + $0x40] sm:$0xff]
    %v74 = vld [vmem:[#allocation5 + $0x48] sm:$0xff]
    %v75 = vld [vmem:[#allocation5 + $0x50] sm:$0xff]
    %v76 = vld [vmem:[#allocation5 + $0x58] sm:$0xff]
    %v77 = vld [vmem:[#allocation5 + $0x60] sm:$0xff]
    %v78 = vld [vmem:[#allocation5 + $0x68] sm:$0xff]
    %v79 = vld [vmem:[#allocation5 + $0x70] sm:$0xff]
    %v80 = vld [vmem:[#allocation5 + $0x78] sm:$0xff]
    %v81 = vld [vmem:[%s2] sm:$0x1]
    %82 = vmatprep.subr.mxu0 0.0
    %83 = vmatpush1.xpose.msra.mxu0 %v65
    %84 = vmatprep.subr.mxu0 0.0
    %85 = vmatpush1.xpose.msra.mxu0 %v66
    %86 = vmatprep.subr.mxu0 0.0
    %87 = vmatpush1.xpose.msra.mxu0 %v67
    %88 = vmatprep.subr.mxu0 0.0
    %89 = vmatpush1.xpose.msra.mxu0 %v68
    %90 = vmatprep.subr.mxu0 0.0
    %91 = vmatpush1.xpose.msra.mxu0 %v69
    %92 = vmatprep.subr.mxu0 0.0
    %93 = vmatpush1.xpose.msra.mxu0 %v70
    %94 = vmatprep.subr.mxu0 0.0
    %95 = vmatpush1.xpose.msra.mxu0 %v71
    %96 = vmatprep.subr.mxu0 0.0
    %97 = vmatpush1.xpose.msra.mxu0 %v72
    %98 = vmatprep.subr.mxu0 0.0
    %99 = vmatpush1.xpose.msra.mxu0 %v73
    %100 = vmatprep.subr.mxu0 0.0
    %101 = vmatpush1.xpose.msra.mxu0 %v74
    %102 = vmatprep.subr.mxu0 0.0
    %103 = vmatpush1.xpose.msra.mxu0 %v75
    %104 = vmatprep.subr.mxu0 0.0
    %105 = vmatpush1.xpose.msra.mxu0 %v76
    %106 = vmatprep.subr.mxu0 0.0
    %107 = vmatpush1.xpose.msra.mxu0 %v77
    %108 = vmatprep.subr.mxu0 0.0
    %109 = vmatpush1.xpose.msra.mxu0 %v78
    %110 = vmatprep.subr.mxu0 0.0
    %111 = vmatpush1.xpose.msra.mxu0 %v79
    %112 = vmatprep.subr.mxu0 0.0
    %113 = vmatpush1.xpose.msra.mxu0 %v80
    %114 = vmatprep.subr.mxu0 0.0
    %115 = vmatpush1.xpose.msra.mxu0 0.0
    %116 = vmatprep.subr.mxu0 0.0
    %117 = vmatpush1.xpose.msra.mxu0 0.0
    %118 = vmatprep.subr.mxu0 0.0
    %119 = vmatpush1.xpose.msra.mxu0 0.0
    %120 = vmatprep.subr.mxu0 0.0
    %121 = vmatpush1.xpose.msra.mxu0 0.0
    %122 = vmatprep.subr.mxu0 0.0
    %123 = vmatpush1.xpose.msra.mxu0 0.0
    %124 = vmatprep.subr.mxu0 0.0
    %125 = vmatpush1.xpose.msra.mxu0 0.0
    %126 = vmatprep.subr.mxu0 0.0
    %127 = vmatpush1.xpose.msra.mxu0 0.0
    %128 = vmatprep.subr.mxu0 0.0
    %129 = vmatpush1.xpose.msra.mxu0 0.0
    %130 = vmatprep.subr.mxu0 0.0
    %131 = vmatpush1.xpose.msra.mxu0 0.0
    %132 = vmatprep.subr.mxu0 0.0
    %133 = vmatpush1.xpose.msra.mxu0 0.0
    %134 = vmatprep.subr.mxu0 0.0
    %135 = vmatpush1.xpose.msra.mxu0 0.0
    %136 = vmatprep.subr.mxu0 0.0
    %137 = vmatpush1.xpose.msra.mxu0 0.0
    %138 = vmatprep.subr.mxu0 0.0
    %139 = vmatpush1.xpose.msra.mxu0 0.0
    %140 = vmatprep.subr.mxu0 0.0
    %141 = vmatpush1.xpose.msra.mxu0 0.0
    %142 = vmatprep.subr.mxu0 0.0
    %143 = vmatpush1.xpose.msra.mxu0 0.0
    %144 = vmatprep.subr.mxu0 0.0
    %145 = vmatpush1.xpose.msra.mxu0 0.0
    %146 = vmatprep.mubr.f32.mxu0 0.0
    %147 = vmatmul.mubr.f32.gmra.mrb[0].mxu0 %v49
    %v148 = vpop.f32.mrb[0].mxu0
    %v149 = vadd.f32 0.0, %v148
    %v150 = vpop.f32.mrb[0].mxu0
    %151 = vmatprep.mubr.f32.mxu0 0.0
    %152 = vmatmul.mubr.f32.gmra.mrb[0].mxu0 %v50
    %v153 = vpop.f32.mrb[0].mxu0
    %v154 = vadd.f32 0.0, %v153
    %v155 = vpop.f32.mrb[0].mxu0
    %156 = vmatprep.mubr.f32.mxu0 0.0
    %157 = vmatmul.mubr.f32.gmra.mrb[0].mxu0 %v51
    %v158 = vpop.f32.mrb[0].mxu0
    %v159 = vadd.f32 0.0, %v158
    %v160 = vpop.f32.mrb[0].mxu0
    %161 = vmatprep.mubr.f32.mxu0 0.0
    %162 = vmatmul.mubr.f32.gmra.mrb[0].mxu0 %v52
    %v163 = vpop.f32.mrb[0].mxu0
    %v164 = vadd.f32 0.0, %v163
    %v165 = vpop.f32.mrb[0].mxu0
    %166 = vmatprep.mubr.f32.mxu0 0.0
    %167 = vmatmul.mubr.f32.gmra.mrb[0].mxu0 %v53
    %v168 = vpop.f32.mrb[0].mxu0
    %v169 = vadd.f32 0.0, %v168
    %v170 = vpop.f32.mrb[0].mxu0
    %171 = vmatprep.mubr.f32.mxu0 0.0
    %172 = vmatmul.mubr.f32.gmra.mrb[0].mxu0 %v54
    %v173 = vpop.f32.mrb[0].mxu0
    %v174 = vadd.f32 0.0, %v173
    %v175 = vpop.f32.mrb[0].mxu0
    %176 = vmatprep.mubr.f32.mxu0 0.0
    %177 = vmatmul.mubr.f32.gmra.mrb[0].mxu0 %v55
    %v178 = vpop.f32.mrb[0].mxu0
    %v179 = vadd.f32 0.0, %v178
    %v180 = vpop.f32.mrb[0].mxu0
    %181 = vmatprep.mubr.f32.mxu0 0.0
    %182 = vmatmul.mubr.f32.gmra.mrb[0].mxu0 %v56
    %v183 = vpop.f32.mrb[0].mxu0
    %v184 = vadd.f32 0.0, %v183
    %v185 = vpop.f32.mrb[0].mxu0
    %186 = vmatprep.mubr.f32.mxu0 0.0
    %187 = vmatmul.mubr.f32.gmra.mrb[0].mxu0 %v57
    %v188 = vpop.f32.mrb[0].mxu0
    %v189 = vadd.f32 0.0, %v188
    %v190 = vpop.f32.mrb[0].mxu0
    %191 = vmatprep.mubr.f32.mxu0 0.0
    %192 = vmatmul.mubr.f32.gmra.mrb[0].mxu0 %v58
    %v193 = vpop.f32.mrb[0].mxu0
    %v194 = vadd.f32 0.0, %v193
    %v195 = vpop.f32.mrb[0].mxu0
    %196 = vmatprep.mubr.f32.mxu0 0.0
    %197 = vmatmul.mubr.f32.gmra.mrb[0].mxu0 %v59
    %v198 = vpop.f32.mrb[0].mxu0
    %v199 = vadd.f32 0.0, %v198
    %v200 = vpop.f32.mrb[0].mxu0
    %201 = vmatprep.mubr.f32.mxu0 0.0
    %202 = vmatmul.mubr.f32.gmra.mrb[0].mxu0 %v60
    %v203 = vpop.f32.mrb[0].mxu0
    %v204 = vadd.f32 0.0, %v203
    %v205 = vpop.f32.mrb[0].mxu0
    %206 = vmatprep.mubr.f32.mxu0 0.0
    %207 = vmatmul.mubr.f32.gmra.mrb[0].mxu0 %v61
    %v208 = vpop.f32.mrb[0].mxu0
    %v209 = vadd.f32 0.0, %v208
    %v210 = vpop.f32.mrb[0].mxu0
    %211 = vmatprep.mubr.f32.mxu0 0.0
    %212 = vmatmul.mubr.f32.gmra.mrb[0].mxu0 %v62
    %v213 = vpop.f32.mrb[0].mxu0
    %v214 = vadd.f32 0.0, %v213
    %v215 = vpop.f32.mrb[0].mxu0
    %216 = vmatprep.mubr.f32.mxu0 0.0
    %217 = vmatmul.mubr.f32.gmra.mrb[0].mxu0 %v63
    %v218 = vpop.f32.mrb[0].mxu0
    %v219 = vadd.f32 0.0, %v218
    %v220 = vpop.f32.mrb[0].mxu0
    %221 = vmatprep.mubr.f32.mxu0 0.0
    %222 = vmatmul.mubr.f32.gmra.mrb[0].mxu0 %v64
    %v223 = vpop.f32.mrb[0].mxu0
    %v224 = vadd.f32 0.0, %v223
    %v225 = vpop.f32.mrb[0].mxu0
    %226 = vdwg.mxu0
    %v227 = vmul.f32 %v149, 2.0
    %v228 = vmul.f32 %v154, 2.0
    %v229 = vmul.f32 %v159, 2.0
    %v230 = vmul.f32 %v164, 2.0
    %v231 = vmul.f32 %v169, 2.0
    %v232 = vmul.f32 %v174, 2.0
    %v233 = vmul.f32 %v179, 2.0
    %v234 = vmul.f32 %v184, 2.0
    %v235 = vmul.f32 %v189, 2.0
    %v236 = vmul.f32 %v194, 2.0
    %v237 = vmul.f32 %v199, 2.0
    %v238 = vmul.f32 %v204, 2.0
    %v239 = vmul.f32 %v209, 2.0
    %v240 = vmul.f32 %v214, 2.0
    %v241 = vmul.f32 %v219, 2.0
    %v242 = vmul.f32 %v224, 2.0
    %v244 = vlaneseq
    %v245 = vshrl.u32 %v244, 7
    %v246 = vsub.s32 0, %v245
    %v247 = vrot.slane %v81, %v246
    %v249 = vsub.f32 %v247, %v227
    %v250 = vsub.f32 %v247, %v228
    %v251 = vsub.f32 %v247, %v229
    %v252 = vsub.f32 %v247, %v230
    %v253 = vsub.f32 %v247, %v231
    %v254 = vsub.f32 %v247, %v232
    %v255 = vsub.f32 %v247, %v233
    %v256 = vsub.f32 %v247, %v234
    %v257 = vsub.f32 %v247, %v235
    %v258 = vsub.f32 %v247, %v236
    %v259 = vsub.f32 %v247, %v237
    %v260 = vsub.f32 %v247, %v238
    %v261 = vsub.f32 %v247, %v239
    %v262 = vsub.f32 %v247, %v240
    %v263 = vsub.f32 %v247, %v241
    %v264 = vsub.f32 %v247, %v242
    %265 = vmin.xlane.f32.xlu0 %v249
    %v266 = vpop.xlane.xlu0 %265
    %267 = vmin.xlane.f32.xlu0 %v250
    %v268 = vpop.xlane.xlu0 %267
    %269 = vmin.xlane.f32.xlu0 %v251
    %v270 = vpop.xlane.xlu0 %269
    %271 = vmin.xlane.f32.xlu0 %v252
    %v272 = vpop.xlane.xlu0 %271
    %273 = vmin.xlane.f32.xlu0 %v253
    %v274 = vpop.xlane.xlu0 %273
    %275 = vmin.xlane.f32.xlu0 %v254
    %v276 = vpop.xlane.xlu0 %275
    %277 = vmin.xlane.f32.xlu0 %v255
    %v278 = vpop.xlane.xlu0 %277
    %279 = vmin.xlane.f32.xlu0 %v256
    %v280 = vpop.xlane.xlu0 %279
    %281 = vmin.xlane.f32.xlu0 %v257
    %v282 = vpop.xlane.xlu0 %281
    %283 = vmin.xlane.f32.xlu0 %v258
    %v284 = vpop.xlane.xlu0 %283
    %285 = vmin.xlane.f32.xlu0 %v259
    %v286 = vpop.xlane.xlu0 %285
    %287 = vmin.xlane.f32.xlu0 %v260
    %v288 = vpop.xlane.xlu0 %287
    %289 = vmin.xlane.f32.xlu0 %v261
    %v290 = vpop.xlane.xlu0 %289
    %291 = vmin.xlane.f32.xlu0 %v262
    %v292 = vpop.xlane.xlu0 %291
    %293 = vmin.xlane.f32.xlu0 %v263
    %v294 = vpop.xlane.xlu0 %293
    %295 = vmin.xlane.f32.xlu0 %v264
    %v296 = vpop.xlane.xlu0 %295
    %v297 = vlaneseq
    %v298 = vand.u32 %v297, 127
    %vm299 = vcmp.eq.f32.partialorder %v249, %v266
    %vm300 = vcmp.eq.f32.partialorder %v250, %v268
    %vm301 = vcmp.eq.f32.partialorder %v251, %v270
    %vm302 = vcmp.eq.f32.partialorder %v252, %v272
    %vm303 = vcmp.eq.f32.partialorder %v253, %v274
    %vm304 = vcmp.eq.f32.partialorder %v254, %v276
    %vm305 = vcmp.eq.f32.partialorder %v255, %v278
    %vm306 = vcmp.eq.f32.partialorder %v256, %v280
    %vm307 = vcmp.eq.f32.partialorder %v257, %v282
    %vm308 = vcmp.eq.f32.partialorder %v258, %v284
    %vm309 = vcmp.eq.f32.partialorder %v259, %v286
    %vm310 = vcmp.eq.f32.partialorder %v260, %v288
    %vm311 = vcmp.eq.f32.partialorder %v261, %v290
    %vm312 = vcmp.eq.f32.partialorder %v262, %v292
    %vm313 = vcmp.eq.f32.partialorder %v263, %v294
    %vm314 = vcmp.eq.f32.partialorder %v264, %v296
    %v315 = vsel %vm299, %v298, 128
    %v316 = vsel %vm300, %v298, 128
    %v317 = vsel %vm301, %v298, 128
    %v318 = vsel %vm302, %v298, 128
    %v319 = vsel %vm303, %v298, 128
    %v320 = vsel %vm304, %v298, 128
    %v321 = vsel %vm305, %v298, 128
    %v322 = vsel %vm306, %v298, 128
    %v323 = vsel %vm307, %v298, 128
    %v324 = vsel %vm308, %v298, 128
    %v325 = vsel %vm309, %v298, 128
    %v326 = vsel %vm310, %v298, 128
    %v327 = vsel %vm311, %v298, 128
    %v328 = vsel %vm312, %v298, 128
    %v329 = vsel %vm313, %v298, 128
    %v330 = vsel %vm314, %v298, 128
    %v331 = vand.u32 %v315, 65535
    %v332 = vshra.s32 %v315, 16
    %v333 = vcvt.s32.f32 %v331
    %v334 = vcvt.s32.f32 %v332
    %335 = vmin.xlane.f32.xlu0 %v334
    %v336 = vpop.xlane.xlu0 %335
    %vm337 = vcmp.eq.f32.partialorder %v334, %v336
    %v338 = vsel %vm337, %v333, inf
    %339 = vmin.xlane.f32.xlu0 %v338
    %v340 = vpop.xlane.xlu0 %339
    %v341 = vcvt.f32.s32 %v340
    %v342 = vcvt.f32.s32 %v336
    %v343 = vshll.u32 %v342, 16
    %v344 = vadd.s32 %v343, %v341
    %v345 = vand.u32 %v316, 65535
    %v346 = vshra.s32 %v316, 16
    %v347 = vcvt.s32.f32 %v345
    %v348 = vcvt.s32.f32 %v346
    %349 = vmin.xlane.f32.xlu0 %v348
    %v350 = vpop.xlane.xlu0 %349
    %vm351 = vcmp.eq.f32.partialorder %v348, %v350
    %v352 = vsel %vm351, %v347, inf
    %353 = vmin.xlane.f32.xlu0 %v352
    %v354 = vpop.xlane.xlu0 %353
    %v355 = vcvt.f32.s32 %v354
    %v356 = vcvt.f32.s32 %v350
    %v357 = vshll.u32 %v356, 16
    %v358 = vadd.s32 %v357, %v355
    %v359 = vand.u32 %v317, 65535
    %v360 = vshra.s32 %v317, 16
    %v361 = vcvt.s32.f32 %v359
    %v362 = vcvt.s32.f32 %v360
    %363 = vmin.xlane.f32.xlu0 %v362
    %v364 = vpop.xlane.xlu0 %363
    %vm365 = vcmp.eq.f32.partialorder %v362, %v364
    %v366 = vsel %vm365, %v361, inf
    %367 = vmin.xlane.f32.xlu0 %v366
    %v368 = vpop.xlane.xlu0 %367
    %v369 = vcvt.f32.s32 %v368
    %v370 = vcvt.f32.s32 %v364
    %v371 = vshll.u32 %v370, 16
    %v372 = vadd.s32 %v371, %v369
    %v373 = vand.u32 %v318, 65535
    %v374 = vshra.s32 %v318, 16
    %v375 = vcvt.s32.f32 %v373
    %v376 = vcvt.s32.f32 %v374
    %377 = vmin.xlane.f32.xlu0 %v376
    %v378 = vpop.xlane.xlu0 %377
    %vm379 = vcmp.eq.f32.partialorder %v376, %v378
    %v380 = vsel %vm379, %v375, inf
    %381 = vmin.xlane.f32.xlu0 %v380
    %v382 = vpop.xlane.xlu0 %381
    %v383 = vcvt.f32.s32 %v382
    %v384 = vcvt.f32.s32 %v378
    %v385 = vshll.u32 %v384, 16
    %v386 = vadd.s32 %v385, %v383
    %v387 = vand.u32 %v319, 65535
    %v388 = vshra.s32 %v319, 16
    %v389 = vcvt.s32.f32 %v387
    %v390 = vcvt.s32.f32 %v388
    %391 = vmin.xlane.f32.xlu0 %v390
    %v392 = vpop.xlane.xlu0 %391
    %vm393 = vcmp.eq.f32.partialorder %v390, %v392
    %v394 = vsel %vm393, %v389, inf
    %395 = vmin.xlane.f32.xlu0 %v394
    %v396 = vpop.xlane.xlu0 %395
    %v397 = vcvt.f32.s32 %v396
    %v398 = vcvt.f32.s32 %v392
    %v399 = vshll.u32 %v398, 16
    %v400 = vadd.s32 %v399, %v397
    %v401 = vand.u32 %v320, 65535
    %v402 = vshra.s32 %v320, 16
    %v403 = vcvt.s32.f32 %v401
    %v404 = vcvt.s32.f32 %v402
    %405 = vmin.xlane.f32.xlu0 %v404
    %v406 = vpop.xlane.xlu0 %405
    %vm407 = vcmp.eq.f32.partialorder %v404, %v406
    %v408 = vsel %vm407, %v403, inf
    %409 = vmin.xlane.f32.xlu0 %v408
    %v410 = vpop.xlane.xlu0 %409
    %v411 = vcvt.f32.s32 %v410
    %v412 = vcvt.f32.s32 %v406
    %v413 = vshll.u32 %v412, 16
    %v414 = vadd.s32 %v413, %v411
    %v415 = vand.u32 %v321, 65535
    %v416 = vshra.s32 %v321, 16
    %v417 = vcvt.s32.f32 %v415
    %v418 = vcvt.s32.f32 %v416
    %419 = vmin.xlane.f32.xlu0 %v418
    %v420 = vpop.xlane.xlu0 %419
    %vm421 = vcmp.eq.f32.partialorder %v418, %v420
    %v422 = vsel %vm421, %v417, inf
    %423 = vmin.xlane.f32.xlu0 %v422
    %v424 = vpop.xlane.xlu0 %423
    %v425 = vcvt.f32.s32 %v424
    %v426 = vcvt.f32.s32 %v420
    %v427 = vshll.u32 %v426, 16
    %v428 = vadd.s32 %v427, %v425
    %v429 = vand.u32 %v322, 65535
    %v430 = vshra.s32 %v322, 16
    %v431 = vcvt.s32.f32 %v429
    %v432 = vcvt.s32.f32 %v430
    %433 = vmin.xlane.f32.xlu0 %v432
    %v434 = vpop.xlane.xlu0 %433
    %vm435 = vcmp.eq.f32.partialorder %v432, %v434
    %v436 = vsel %vm435, %v431, inf
    %437 = vmin.xlane.f32.xlu0 %v436
    %v438 = vpop.xlane.xlu0 %437
    %v439 = vcvt.f32.s32 %v438
    %v440 = vcvt.f32.s32 %v434
    %v441 = vshll.u32 %v440, 16
    %v442 = vadd.s32 %v441, %v439
    %v443 = vand.u32 %v323, 65535
    %v444 = vshra.s32 %v323, 16
    %v445 = vcvt.s32.f32 %v443
    %v446 = vcvt.s32.f32 %v444
    %447 = vmin.xlane.f32.xlu0 %v446
    %v448 = vpop.xlane.xlu0 %447
    %vm449 = vcmp.eq.f32.partialorder %v446, %v448
    %v450 = vsel %vm449, %v445, inf
    %451 = vmin.xlane.f32.xlu0 %v450
    %v452 = vpop.xlane.xlu0 %451
    %v453 = vcvt.f32.s32 %v452
    %v454 = vcvt.f32.s32 %v448
    %v455 = vshll.u32 %v454, 16
    %v456 = vadd.s32 %v455, %v453
    %v457 = vand.u32 %v324, 65535
    %v458 = vshra.s32 %v324, 16
    %v459 = vcvt.s32.f32 %v457
    %v460 = vcvt.s32.f32 %v458
    %461 = vmin.xlane.f32.xlu0 %v460
    %v462 = vpop.xlane.xlu0 %461
    %vm463 = vcmp.eq.f32.partialorder %v460, %v462
    %v464 = vsel %vm463, %v459, inf
    %465 = vmin.xlane.f32.xlu0 %v464
    %v466 = vpop.xlane.xlu0 %465
    %v467 = vcvt.f32.s32 %v466
    %v468 = vcvt.f32.s32 %v462
    %v469 = vshll.u32 %v468, 16
    %v470 = vadd.s32 %v469, %v467
    %v471 = vand.u32 %v325, 65535
    %v472 = vshra.s32 %v325, 16
    %v473 = vcvt.s32.f32 %v471
    %v474 = vcvt.s32.f32 %v472
    %475 = vmin.xlane.f32.xlu0 %v474
    %v476 = vpop.xlane.xlu0 %475
    %vm477 = vcmp.eq.f32.partialorder %v474, %v476
    %v478 = vsel %vm477, %v473, inf
    %479 = vmin.xlane.f32.xlu0 %v478
    %v480 = vpop.xlane.xlu0 %479
    %v481 = vcvt.f32.s32 %v480
    %v482 = vcvt.f32.s32 %v476
    %v483 = vshll.u32 %v482, 16
    %v484 = vadd.s32 %v483, %v481
    %v485 = vand.u32 %v326, 65535
    %v486 = vshra.s32 %v326, 16
    %v487 = vcvt.s32.f32 %v485
    %v488 = vcvt.s32.f32 %v486
    %489 = vmin.xlane.f32.xlu0 %v488
    %v490 = vpop.xlane.xlu0 %489
    %vm491 = vcmp.eq.f32.partialorder %v488, %v490
    %v492 = vsel %vm491, %v487, inf
    %493 = vmin.xlane.f32.xlu0 %v492
    %v494 = vpop.xlane.xlu0 %493
    %v495 = vcvt.f32.s32 %v494
    %v496 = vcvt.f32.s32 %v490
    %v497 = vshll.u32 %v496, 16
    %v498 = vadd.s32 %v497, %v495
    %v499 = vand.u32 %v327, 65535
    %v500 = vshra.s32 %v327, 16
    %v501 = vcvt.s32.f32 %v499
    %v502 = vcvt.s32.f32 %v500
    %503 = vmin.xlane.f32.xlu0 %v502
    %v504 = vpop.xlane.xlu0 %503
    %vm505 = vcmp.eq.f32.partialorder %v502, %v504
    %v506 = vsel %vm505, %v501, inf
    %507 = vmin.xlane.f32.xlu0 %v506
    %v508 = vpop.xlane.xlu0 %507
    %v509 = vcvt.f32.s32 %v508
    %v510 = vcvt.f32.s32 %v504
    %v511 = vshll.u32 %v510, 16
    %v512 = vadd.s32 %v511, %v509
    %v513 = vand.u32 %v328, 65535
    %v514 = vshra.s32 %v328, 16
    %v515 = vcvt.s32.f32 %v513
    %v516 = vcvt.s32.f32 %v514
    %517 = vmin.xlane.f32.xlu0 %v516
    %v518 = vpop.xlane.xlu0 %517
    %vm519 = vcmp.eq.f32.partialorder %v516, %v518
    %v520 = vsel %vm519, %v515, inf
    %521 = vmin.xlane.f32.xlu0 %v520
    %v522 = vpop.xlane.xlu0 %521
    %v523 = vcvt.f32.s32 %v522
    %v524 = vcvt.f32.s32 %v518
    %v525 = vshll.u32 %v524, 16
    %v526 = vadd.s32 %v525, %v523
    %v527 = vand.u32 %v329, 65535
    %v528 = vshra.s32 %v329, 16
    %v529 = vcvt.s32.f32 %v527
    %v530 = vcvt.s32.f32 %v528
    %531 = vmin.xlane.f32.xlu0 %v530
    %v532 = vpop.xlane.xlu0 %531
    %vm533 = vcmp.eq.f32.partialorder %v530, %v532
    %v534 = vsel %vm533, %v529, inf
    %535 = vmin.xlane.f32.xlu0 %v534
    %v536 = vpop.xlane.xlu0 %535
    %v537 = vcvt.f32.s32 %v536
    %v538 = vcvt.f32.s32 %v532
    %v539 = vshll.u32 %v538, 16
    %v540 = vadd.s32 %v539, %v537
    %v541 = vand.u32 %v330, 65535
    %v542 = vshra.s32 %v330, 16
    %v543 = vcvt.s32.f32 %v541
    %v544 = vcvt.s32.f32 %v542
    %545 = vmin.xlane.f32.xlu0 %v544
    %v546 = vpop.xlane.xlu0 %545
    %vm547 = vcmp.eq.f32.partialorder %v544, %v546
    %v548 = vsel %vm547, %v543, inf
    %549 = vmin.xlane.f32.xlu0 %v548
    %v550 = vpop.xlane.xlu0 %549
    %v551 = vcvt.f32.s32 %v550
    %v552 = vcvt.f32.s32 %v546
    %v553 = vshll.u32 %v552, 16
    %v554 = vadd.s32 %v553, %v551
    %vm555 = vcmp.eq.s32.totalorder %v298, %v344
    %vm556 = vcmp.eq.s32.totalorder %v298, %v358
    %vm557 = vcmp.eq.s32.totalorder %v298, %v372
    %vm558 = vcmp.eq.s32.totalorder %v298, %v386
    %vm559 = vcmp.eq.s32.totalorder %v298, %v400
    %vm560 = vcmp.eq.s32.totalorder %v298, %v414
    %vm561 = vcmp.eq.s32.totalorder %v298, %v428
    %vm562 = vcmp.eq.s32.totalorder %v298, %v442
    %vm563 = vcmp.eq.s32.totalorder %v298, %v456
    %vm564 = vcmp.eq.s32.totalorder %v298, %v470
    %vm565 = vcmp.eq.s32.totalorder %v298, %v484
    %vm566 = vcmp.eq.s32.totalorder %v298, %v498
    %vm567 = vcmp.eq.s32.totalorder %v298, %v512
    %vm568 = vcmp.eq.s32.totalorder %v298, %v526
    %vm569 = vcmp.eq.s32.totalorder %v298, %v540
    %vm570 = vcmp.eq.s32.totalorder %v298, %v554
    %v571 = vsel %vm555, 1, 0
    %v572 = vsel %vm556, 1, 0
    %v573 = vsel %vm557, 1, 0
    %v574 = vsel %vm558, 1, 0
    %v575 = vsel %vm559, 1, 0
    %v576 = vsel %vm560, 1, 0
    %v577 = vsel %vm561, 1, 0
    %v578 = vsel %vm562, 1, 0
    %v579 = vsel %vm563, 1, 0
    %v580 = vsel %vm564, 1, 0
    %v581 = vsel %vm565, 1, 0
    %v582 = vsel %vm566, 1, 0
    %v583 = vsel %vm567, 1, 0
    %v584 = vsel %vm568, 1, 0
    %v585 = vsel %vm569, 1, 0
    %v586 = vsel %vm570, 1, 0
    %v587 = vcvt.s32.f32 %v571
    %v588 = vcvt.s32.f32 %v572
    %v589 = vcvt.s32.f32 %v573
    %v590 = vcvt.s32.f32 %v574
    %v591 = vcvt.s32.f32 %v575
    %v592 = vcvt.s32.f32 %v576
    %v593 = vcvt.s32.f32 %v577
    %v594 = vcvt.s32.f32 %v578
    %v595 = vcvt.s32.f32 %v579
    %v596 = vcvt.s32.f32 %v580
    %v597 = vcvt.s32.f32 %v581
    %v598 = vcvt.s32.f32 %v582
    %v599 = vcvt.s32.f32 %v583
    %v600 = vcvt.s32.f32 %v584
    %v601 = vcvt.s32.f32 %v585
    %v602 = vcvt.s32.f32 %v586
    %603 = vmatprep.subr.mxu0 0.0
    %604 = vmatpush1.msra.mxu0 %v65
    %605 = vmatprep.subr.mxu0 0.0
    %606 = vmatpush1.msra.mxu0 %v66
    %607 = vmatprep.subr.mxu0 0.0
    %608 = vmatpush1.msra.mxu0 %v67
    %609 = vmatprep.subr.mxu0 0.0
    %610 = vmatpush1.msra.mxu0 %v68
    %611 = vmatprep.subr.mxu0 0.0
    %612 = vmatpush1.msra.mxu0 %v69
    %613 = vmatprep.subr.mxu0 0.0
    %614 = vmatpush1.msra.mxu0 %v70
    %615 = vmatprep.subr.mxu0 0.0
    %616 = vmatpush1.msra.mxu0 %v71
    %617 = vmatprep.subr.mxu0 0.0
    %618 = vmatpush1.msra.mxu0 %v72
    %619 = vmatprep.subr.mxu0 0.0
    %620 = vmatpush1.msra.mxu0 %v73
    %621 = vmatprep.subr.mxu0 0.0
    %622 = vmatpush1.msra.mxu0 %v74
    %623 = vmatprep.subr.mxu0 0.0
    %624 = vmatpush1.msra.mxu0 %v75
    %625 = vmatprep.subr.mxu0 0.0
    %626 = vmatpush1.msra.mxu0 %v76
    %627 = vmatprep.subr.mxu0 0.0
    %628 = vmatpush1.msra.mxu0 %v77
    %629 = vmatprep.subr.mxu0 0.0
    %630 = vmatpush1.msra.mxu0 %v78
    %631 = vmatprep.subr.mxu0 0.0
    %632 = vmatpush1.msra.mxu0 %v79
    %633 = vmatprep.subr.mxu0 0.0
    %634 = vmatpush1.msra.mxu0 %v80
    %635 = vmatprep.subr.mxu0 0.0
    %636 = vmatpush1.msra.mxu0 0.0
    %637 = vmatprep.subr.mxu0 0.0
    %638 = vmatpush1.msra.mxu0 0.0
    %639 = vmatprep.subr.mxu0 0.0
    %640 = vmatpush1.msra.mxu0 0.0
    %641 = vmatprep.subr.mxu0 0.0
    %642 = vmatpush1.msra.mxu0 0.0
    %643 = vmatprep.subr.mxu0 0.0
    %644 = vmatpush1.msra.mxu0 0.0
    %645 = vmatprep.subr.mxu0 0.0
    %646 = vmatpush1.msra.mxu0 0.0
    %647 = vmatprep.subr.mxu0 0.0
    %648 = vmatpush1.msra.mxu0 0.0
    %649 = vmatprep.subr.mxu0 0.0
    %650 = vmatpush1.msra.mxu0 0.0
    %651 = vmatprep.subr.mxu0 0.0
    %652 = vmatpush1.msra.mxu0 0.0
    %653 = vmatprep.subr.mxu0 0.0
    %654 = vmatpush1.msra.mxu0 0.0
    %655 = vmatprep.subr.mxu0 0.0
    %656 = vmatpush1.msra.mxu0 0.0
    %657 = vmatprep.subr.mxu0 0.0
    %658 = vmatpush1.msra.mxu0 0.0
    %659 = vmatprep.subr.mxu0 0.0
    %660 = vmatpush1.msra.mxu0 0.0
    %661 = vmatprep.subr.mxu0 0.0
    %662 = vmatpush1.msra.mxu0 0.0
    %663 = vmatprep.subr.mxu0 0.0
    %664 = vmatpush1.msra.mxu0 0.0
    %665 = vmatprep.subr.mxu0 0.0
    %666 = vmatpush1.msra.mxu0 0.0
    %667 = vmatprep.mubr.f32.mxu0 0.0
    %668 = vmatmul.mubr.f32.gmra.mrb[0].mxu0 %v587
    %v669 = vpop.f32.mrb[0].mxu0
    %v670 = vadd.f32 0.0, %v669
    %v671 = vpop.f32.mrb[0].mxu0
    %672 = vmatprep.mubr.f32.mxu0 0.0
    %673 = vmatmul.mubr.f32.gmra.mrb[0].mxu0 %v588
    %v674 = vpop.f32.mrb[0].mxu0
    %v675 = vadd.f32 0.0, %v674
    %v676 = vpop.f32.mrb[0].mxu0
    %677 = vmatprep.mubr.f32.mxu0 0.0
    %678 = vmatmul.mubr.f32.gmra.mrb[0].mxu0 %v589
    %v679 = vpop.f32.mrb[0].mxu0
    %v680 = vadd.f32 0.0, %v679
    %v681 = vpop.f32.mrb[0].mxu0
    %682 = vmatprep.mubr.f32.mxu0 0.0
    %683 = vmatmul.mubr.f32.gmra.mrb[0].mxu0 %v590
    %v684 = vpop.f32.mrb[0].mxu0
    %v685 = vadd.f32 0.0, %v684
    %v686 = vpop.f32.mrb[0].mxu0
    %687 = vmatprep.mubr.f32.mxu0 0.0
    %688 = vmatmul.mubr.f32.gmra.mrb[0].mxu0 %v591
    %v689 = vpop.f32.mrb[0].mxu0
    %v690 = vadd.f32 0.0, %v689
    %v691 = vpop.f32.mrb[0].mxu0
    %692 = vmatprep.mubr.f32.mxu0 0.0
    %693 = vmatmul.mubr.f32.gmra.mrb[0].mxu0 %v592
    %v694 = vpop.f32.mrb[0].mxu0
    %v695 = vadd.f32 0.0, %v694
    %v696 = vpop.f32.mrb[0].mxu0
    %697 = vmatprep.mubr.f32.mxu0 0.0
    %698 = vmatmul.mubr.f32.gmra.mrb[0].mxu0 %v593
    %v699 = vpop.f32.mrb[0].mxu0
    %v700 = vadd.f32 0.0, %v699
    %v701 = vpop.f32.mrb[0].mxu0
    %702 = vmatprep.mubr.f32.mxu0 0.0
    %703 = vmatmul.mubr.f32.gmra.mrb[0].mxu0 %v594
    %v704 = vpop.f32.mrb[0].mxu0
    %v705 = vadd.f32 0.0, %v704
    %v706 = vpop.f32.mrb[0].mxu0
    %707 = vmatprep.mubr.f32.mxu0 0.0
    %708 = vmatmul.mubr.f32.gmra.mrb[0].mxu0 %v595
    %v709 = vpop.f32.mrb[0].mxu0
    %v710 = vadd.f32 0.0, %v709
    %v711 = vpop.f32.mrb[0].mxu0
    %712 = vmatprep.mubr.f32.mxu0 0.0
    %713 = vmatmul.mubr.f32.gmra.mrb[0].mxu0 %v596
    %v714 = vpop.f32.mrb[0].mxu0
    %v715 = vadd.f32 0.0, %v714
    %v716 = vpop.f32.mrb[0].mxu0
    %717 = vmatprep.mubr.f32.mxu0 0.0
    %718 = vmatmul.mubr.f32.gmra.mrb[0].mxu0 %v597
    %v719 = vpop.f32.mrb[0].mxu0
    %v720 = vadd.f32 0.0, %v719
    %v721 = vpop.f32.mrb[0].mxu0
    %722 = vmatprep.mubr.f32.mxu0 0.0
    %723 = vmatmul.mubr.f32.gmra.mrb[0].mxu0 %v598
    %v724 = vpop.f32.mrb[0].mxu0
    %v725 = vadd.f32 0.0, %v724
    %v726 = vpop.f32.mrb[0].mxu0
    %727 = vmatprep.mubr.f32.mxu0 0.0
    %728 = vmatmul.mubr.f32.gmra.mrb[0].mxu0 %v599
    %v729 = vpop.f32.mrb[0].mxu0
    %v730 = vadd.f32 0.0, %v729
    %v731 = vpop.f32.mrb[0].mxu0
    %732 = vmatprep.mubr.f32.mxu0 0.0
    %733 = vmatmul.mubr.f32.gmra.mrb[0].mxu0 %v600
    %v734 = vpop.f32.mrb[0].mxu0
    %v735 = vadd.f32 0.0, %v734
    %v736 = vpop.f32.mrb[0].mxu0
    %737 = vmatprep.mubr.f32.mxu0 0.0
    %738 = vmatmul.mubr.f32.gmra.mrb[0].mxu0 %v601
    %v739 = vpop.f32.mrb[0].mxu0
    %v740 = vadd.f32 0.0, %v739
    %v741 = vpop.f32.mrb[0].mxu0
    %742 = vmatprep.mubr.f32.mxu0 0.0
    %743 = vmatmul.mubr.f32.gmra.mrb[0].mxu0 %v602
    %v744 = vpop.f32.mrb[0].mxu0
    %v745 = vadd.f32 0.0, %v744
    %v746 = vpop.f32.mrb[0].mxu0
    %747 = vdwg.mxu0
    %s748 = smul.u32 0, 128
    %v749 = vlaneseq
    %v750 = vshrl.u32 %v749, 7
    %v751 = vadd.s32 %v750, 8
    %v752 = vadd.s32 %v750, 16
    %v753 = vadd.s32 %v750, 24
    %v754 = vadd.s32 %v750, 32
    %v755 = vadd.s32 %v750, 40
    %v756 = vadd.s32 %v750, 48
    %v757 = vadd.s32 %v750, 56
    %v758 = vadd.s32 %v750, 64
    %v759 = vadd.s32 %v750, 72
    %v760 = vadd.s32 %v750, 80
    %v761 = vadd.s32 %v750, 88
    %v762 = vadd.s32 %v750, 96
    %v763 = vadd.s32 %v750, 104
    %v764 = vadd.s32 %v750, 112
    %v765 = vadd.s32 %v750, 120
    %v766 = vstv %s748
    %v767 = vadd.s32 %v766, %v750
    %v768 = vadd.s32 %v766, %v751
    %v769 = vadd.s32 %v766, %v752
    %v770 = vadd.s32 %v766, %v753
    %v771 = vadd.s32 %v766, %v754
    %v772 = vadd.s32 %v766, %v755
    %v773 = vadd.s32 %v766, %v756
    %v774 = vadd.s32 %v766, %v757
    %v775 = vadd.s32 %v766, %v758
    %v776 = vadd.s32 %v766, %v759
    %v777 = vadd.s32 %v766, %v760
    %v778 = vadd.s32 %v766, %v761
    %v779 = vadd.s32 %v766, %v762
    %v780 = vadd.s32 %v766, %v763
    %v781 = vadd.s32 %v766, %v764
    %v782 = vadd.s32 %v766, %v765
    %vm783 = vcmp.lt.s32.totalorder %v767, 32
    %vm784 = vcmp.lt.s32.totalorder %v768, 32
    %vm785 = vcmp.lt.s32.totalorder %v769, 32
    %vm786 = vcmp.lt.s32.totalorder %v770, 32
    %vm787 = vcmp.lt.s32.totalorder %v771, 32
    %vm788 = vcmp.lt.s32.totalorder %v772, 32
    %vm789 = vcmp.lt.s32.totalorder %v773, 32
    %vm790 = vcmp.lt.s32.totalorder %v774, 32
    %vm791 = vcmp.lt.s32.totalorder %v775, 32
    %vm792 = vcmp.lt.s32.totalorder %v776, 32
    %vm793 = vcmp.lt.s32.totalorder %v777, 32
    %vm794 = vcmp.lt.s32.totalorder %v778, 32
    %vm795 = vcmp.lt.s32.totalorder %v779, 32
    %vm796 = vcmp.lt.s32.totalorder %v780, 32
    %vm797 = vcmp.lt.s32.totalorder %v781, 32
    %vm798 = vcmp.lt.s32.totalorder %v782, 32
    %v799 = vsel %vm783, 1, 0
    %v800 = vsel %vm784, 1, 0
    %v801 = vsel %vm785, 1, 0
    %v802 = vsel %vm786, 1, 0
    %v803 = vsel %vm787, 1, 0
    %v804 = vsel %vm788, 1, 0
    %v805 = vsel %vm789, 1, 0
    %v806 = vsel %vm790, 1, 0
    %v807 = vsel %vm791, 1, 0
    %v808 = vsel %vm792, 1, 0
    %v809 = vsel %vm793, 1, 0
    %v810 = vsel %vm794, 1, 0
    %v811 = vsel %vm795, 1, 0
    %v812 = vsel %vm796, 1, 0
    %v813 = vsel %vm797, 1, 0
    %v814 = vsel %vm798, 1, 0
    %v815 = vcvt.s32.f32 %v799
    %v816 = vcvt.s32.f32 %v800
    %v817 = vcvt.s32.f32 %v801
    %v818 = vcvt.s32.f32 %v802
    %v819 = vcvt.s32.f32 %v803
    %v820 = vcvt.s32.f32 %v804
    %v821 = vcvt.s32.f32 %v805
    %v822 = vcvt.s32.f32 %v806
    %v823 = vcvt.s32.f32 %v807
    %v824 = vcvt.s32.f32 %v808
    %v825 = vcvt.s32.f32 %v809
    %v826 = vcvt.s32.f32 %v810
    %v827 = vcvt.s32.f32 %v811
    %v828 = vcvt.s32.f32 %v812
    %v829 = vcvt.s32.f32 %v813
    %v830 = vcvt.s32.f32 %v814
    %831 = vst [vmem:[#allocation7] sm:$0xff] %v670
    %832 = vst [vmem:[#allocation7 + $0x8] sm:$0xff] %v675
    %833 = vst [vmem:[#allocation7 + $0x10] sm:$0xff] %v680
    %834 = vst [vmem:[#allocation7 + $0x18] sm:$0xff] %v685
    %835 = vst [vmem:[#allocation7 + $0x20] sm:$0xff] %v690
    %836 = vst [vmem:[#allocation7 + $0x28] sm:$0xff] %v695
    %837 = vst [vmem:[#allocation7 + $0x30] sm:$0xff] %v700
    %838 = vst [vmem:[#allocation7 + $0x38] sm:$0xff] %v705
    %839 = vst [vmem:[#allocation7 + $0x40] sm:$0xff] %v710
    %840 = vst [vmem:[#allocation7 + $0x48] sm:$0xff] %v715
    %841 = vst [vmem:[#allocation7 + $0x50] sm:$0xff] %v720
    %842 = vst [vmem:[#allocation7 + $0x58] sm:$0xff] %v725
    %843 = vst [vmem:[#allocation7 + $0x60] sm:$0xff] %v730
    %844 = vst [vmem:[#allocation7 + $0x68] sm:$0xff] %v735
    %845 = vst [vmem:[#allocation7 + $0x70] sm:$0xff] %v740
    %846 = vst [vmem:[#allocation7 + $0x78] sm:$0xff] %v745
    %v847 = vlaneseq
    %v848 = vshrl.u32 %v847, 7
    %v849 = vsub.s32 %v298, %v848
    %v850 = vrot.slane %v344, %v849
    %v851 = vadd.s32 %v298, 4294967288
    %v852 = vlaneseq
    %v853 = vshrl.u32 %v852, 7
    %v854 = vsub.s32 %v851, %v853
    %v855 = vrot.slane %v358, %v854
    %vm856 = vcmask 130112
    %v857 = vsel %vm856, %v855, %v850
    %v858 = vadd.s32 %v298, 4294967280
    %v859 = vlaneseq
    %v860 = vshrl.u32 %v859, 7
    %v861 = vsub.s32 %v858, %v860
    %v862 = vrot.slane %v372, %v861
    %vm863 = vcmask 195712
    %v864 = vsel %vm863, %v862, %v857
    %v865 = vadd.s32 %v298, 4294967272
    %v866 = vlaneseq
    %v867 = vshrl.u32 %v866, 7
    %v868 = vsub.s32 %v865, %v867
    %v869 = vrot.slane %v386, %v868
    %vm870 = vcmask 261312
    %v871 = vsel %vm870, %v869, %v864
    %v872 = vadd.s32 %v298, 4294967264
    %v873 = vlaneseq
    %v874 = vshrl.u32 %v873, 7
    %v875 = vsub.s32 %v872, %v874
    %v876 = vrot.slane %v400, %v875
    %vm877 = vcmask 326912
    %v878 = vsel %vm877, %v876, %v871
    %v879 = vadd.s32 %v298, 4294967256
    %v880 = vlaneseq
    %v881 = vshrl.u32 %v880, 7
    %v882 = vsub.s32 %v879, %v881
    %v883 = vrot.slane %v414, %v882
    %vm884 = vcmask 392512
    %v885 = vsel %vm884, %v883, %v878
    %v886 = vadd.s32 %v298, 4294967248
    %v887 = vlaneseq
    %v888 = vshrl.u32 %v887, 7
    %v889 = vsub.s32 %v886, %v888
    %v890 = vrot.slane %v428, %v889
    %vm891 = vcmask 458112
    %v892 = vsel %vm891, %v890, %v885
    %v893 = vadd.s32 %v298, 4294967240
    %v894 = vlaneseq
    %v895 = vshrl.u32 %v894, 7
    %v896 = vsub.s32 %v893, %v895
    %v897 = vrot.slane %v442, %v896
    %vm898 = vcmask 523712
    %v899 = vsel %vm898, %v897, %v892
    %v900 = vadd.s32 %v298, 4294967232
    %v901 = vlaneseq
    %v902 = vshrl.u32 %v901, 7
    %v903 = vsub.s32 %v900, %v902
    %v904 = vrot.slane %v456, %v903
    %vm905 = vcmask 589312
    %v906 = vsel %vm905, %v904, %v899
    %v907 = vadd.s32 %v298, 4294967224
    %v908 = vlaneseq
    %v909 = vshrl.u32 %v908, 7
    %v910 = vsub.s32 %v907, %v909
    %v911 = vrot.slane %v470, %v910
    %vm912 = vcmask 654912
    %v913 = vsel %vm912, %v911, %v906
    %v914 = vadd.s32 %v298, 4294967216
    %v915 = vlaneseq
    %v916 = vshrl.u32 %v915, 7
    %v917 = vsub.s32 %v914, %v916
    %v918 = vrot.slane %v484, %v917
    %vm919 = vcmask 720512
    %v920 = vsel %vm919, %v918, %v913
    %v921 = vadd.s32 %v298, 4294967208
    %v922 = vlaneseq
    %v923 = vshrl.u32 %v922, 7
    %v924 = vsub.s32 %v921, %v923
    %v925 = vrot.slane %v498, %v924
    %vm926 = vcmask 786112
    %v927 = vsel %vm926, %v925, %v920
    %v928 = vadd.s32 %v298, 4294967200
    %v929 = vlaneseq
    %v930 = vshrl.u32 %v929, 7
    %v931 = vsub.s32 %v928, %v930
    %v932 = vrot.slane %v512, %v931
    %vm933 = vcmask 851712
    %v934 = vsel %vm933, %v932, %v927
    %v935 = vadd.s32 %v298, 4294967192
    %v936 = vlaneseq
    %v937 = vshrl.u32 %v936, 7
    %v938 = vsub.s32 %v935, %v937
    %v939 = vrot.slane %v526, %v938
    %vm940 = vcmask 917312
    %v941 = vsel %vm940, %v939, %v934
    %v942 = vadd.s32 %v298, 4294967184
    %v943 = vlaneseq
    %v944 = vshrl.u32 %v943, 7
    %v945 = vsub.s32 %v942, %v944
    %v946 = vrot.slane %v540, %v945
    %vm947 = vcmask 982912
    %v948 = vsel %vm947, %v946, %v941
    %v949 = vadd.s32 %v298, 4294967176
    %v950 = vlaneseq
    %v951 = vshrl.u32 %v950, 7
    %v952 = vsub.s32 %v949, %v951
    %v953 = vrot.slane %v554, %v952
    %vm954 = vcmask 1048512
    %v955 = vsel %vm954, %v953, %v948
    %956 = vst [vmem:[#allocation8] sm:$0x1] %v955
    %v957 = vmul.f32 %v587, %v815
    %v958 = vmul.f32 %v588, %v816
    %v959 = vmul.f32 %v589, %v817
    %v960 = vmul.f32 %v590, %v818
    %v961 = vmul.f32 %v591, %v819
    %v962 = vmul.f32 %v592, %v820
    %v963 = vmul.f32 %v593, %v821
    %v964 = vmul.f32 %v594, %v822
    %v965 = vmul.f32 %v595, %v823
    %v966 = vmul.f32 %v596, %v824
    %v967 = vmul.f32 %v597, %v825
    %v968 = vmul.f32 %v598, %v826
    %v969 = vmul.f32 %v599, %v827
    %v970 = vmul.f32 %v600, %v828
    %v971 = vmul.f32 %v601, %v829
    %v972 = vmul.f32 %v602, %v830
    %v973 = vadd.f32 %v957, %v958
    %v974 = vadd.f32 %v973, %v959
    %v975 = vadd.f32 %v974, %v960
    %v976 = vadd.f32 %v975, %v961
    %v977 = vadd.f32 %v976, %v962
    %v978 = vadd.f32 %v977, %v963
    %v979 = vadd.f32 %v978, %v964
    %v980 = vadd.f32 %v979, %v965
    %v981 = vadd.f32 %v980, %v966
    %v982 = vadd.f32 %v981, %v967
    %v983 = vadd.f32 %v982, %v968
    %v984 = vadd.f32 %v983, %v969
    %v985 = vadd.f32 %v984, %v970
    %v986 = vadd.f32 %v985, %v971
    %v987 = vadd.f32 %v986, %v972
    %v988 = vrot.slane %v987, 4
    %v989 = vadd.f32 %v987, %v988
    %v990 = vrot.slane %v989, 2
    %v991 = vadd.f32 %v989, %v990
    %v992 = vrot.slane %v991, 1
    %v993 = vadd.f32 %v991, %v992
    %994 = vst [vmem:[#allocation10] sm:$0x1] %v993
    %v995 = vsub.f32 %v670, %v49
    %v996 = vsub.f32 %v675, %v50
    %v997 = vsub.f32 %v680, %v51
    %v998 = vsub.f32 %v685, %v52
    %v999 = vsub.f32 %v690, %v53
    %v1000 = vsub.f32 %v695, %v54
    %v1001 = vsub.f32 %v700, %v55
    %v1002 = vsub.f32 %v705, %v56
    %v1003 = vsub.f32 %v710, %v57
    %v1004 = vsub.f32 %v715, %v58
    %v1005 = vsub.f32 %v720, %v59
    %v1006 = vsub.f32 %v725, %v60
    %v1007 = vsub.f32 %v730, %v61
    %v1008 = vsub.f32 %v735, %v62
    %v1009 = vsub.f32 %v740, %v63
    %v1010 = vsub.f32 %v745, %v64
    %v1011 = vmul.f32 %v995, %v815
    %v1012 = vmul.f32 %v996, %v816
    %v1013 = vmul.f32 %v997, %v817
    %v1014 = vmul.f32 %v998, %v818
    %v1015 = vmul.f32 %v999, %v819
    %v1016 = vmul.f32 %v1000, %v820
    %v1017 = vmul.f32 %v1001, %v821
    %v1018 = vmul.f32 %v1002, %v822
    %v1019 = vmul.f32 %v1003, %v823
    %v1020 = vmul.f32 %v1004, %v824
    %v1021 = vmul.f32 %v1005, %v825
    %v1022 = vmul.f32 %v1006, %v826
    %v1023 = vmul.f32 %v1007, %v827
    %v1024 = vmul.f32 %v1008, %v828
    %v1025 = vmul.f32 %v1009, %v829
    %v1026 = vmul.f32 %v1010, %v830
    %v1027 = vmul.f32 %v1011, %v1011
    %v1028 = vmul.f32 %v1012, %v1012
    %v1029 = vmul.f32 %v1013, %v1013
    %v1030 = vmul.f32 %v1014, %v1014
    %v1031 = vmul.f32 %v1015, %v1015
    %v1032 = vmul.f32 %v1016, %v1016
    %v1033 = vmul.f32 %v1017, %v1017
    %v1034 = vmul.f32 %v1018, %v1018
    %v1035 = vmul.f32 %v1019, %v1019
    %v1036 = vmul.f32 %v1020, %v1020
    %v1037 = vmul.f32 %v1021, %v1021
    %v1038 = vmul.f32 %v1022, %v1022
    %v1039 = vmul.f32 %v1023, %v1023
    %v1040 = vmul.f32 %v1024, %v1024
    %v1041 = vmul.f32 %v1025, %v1025
    %v1042 = vmul.f32 %v1026, %v1026
    %v1043 = vadd.f32 %v1027, %v1028
    %v1044 = vadd.f32 %v1043, %v1029
    %v1045 = vadd.f32 %v1044, %v1030
    %v1046 = vadd.f32 %v1045, %v1031
    %v1047 = vadd.f32 %v1046, %v1032
    %v1048 = vadd.f32 %v1047, %v1033
    %v1049 = vadd.f32 %v1048, %v1034
    %v1050 = vadd.f32 %v1049, %v1035
    %v1051 = vadd.f32 %v1050, %v1036
    %v1052 = vadd.f32 %v1051, %v1037
    %v1053 = vadd.f32 %v1052, %v1038
    %v1054 = vadd.f32 %v1053, %v1039
    %v1055 = vadd.f32 %v1054, %v1040
    %v1056 = vadd.f32 %v1055, %v1041
    %v1057 = vadd.f32 %v1056, %v1042
    %1058 = vadd.xlane.f32.xlu0 %v1057
    %v1059 = vpop.xlane.xlu0 %1058
    %v1060 = vrot.slane %v1059, 4
    %v1061 = vadd.f32 %v1059, %v1060
    %v1062 = vrot.slane %v1061, 2
    %v1063 = vadd.f32 %v1061, %v1062
    %v1064 = vrot.slane %v1063, 1
    %v1065 = vadd.f32 %v1063, %v1064
    %s1066 = vtos %v1065
    %v1067 = vstv %s1066
    %vm1068 = vcmask 0
    %1069 = vst.msk [vmem:[#allocation11] sm:$0x1] %vm1068, %v1067
    // Predicated region
    $region22: #{tpu_custom_call.1} parent=1 // pred_check
      _
    $region23: #{tpu_custom_call.1} parent=1 // pred_check_branch
      %1071 = sbr.rel (0) target = $region25
    $region24: #{tpu_custom_call.1} parent=1 // pred_region
      %s1073 = ssub.s32 2048, 2048
      %1074 = vsyncadd [#allocation4], %s1073
      %s1075 = sshll.u32 [#allocation7], 4
      %s1076 = int_to_ptr.vmem [resolvable:$true] %s1075
      %1081 = dma.vmem_to_hbm [thread:$0]  %s1076, 2048, %s3, [#allocation4], 128, 128, 8
    $region25: #{tpu_custom_call.1} parent=1 // pred_fallthru
      _
    // Predicated region
    $region26: #{tpu_custom_call.1} parent=1 // pred_check
      _
    $region27: #{tpu_custom_call.1} parent=1 // pred_check_branch
      %1083 = sbr.rel (0) target = $region29
    $region28: #{tpu_custom_call.1} parent=1 // pred_region
      %s1085 = ssub.s32 16, 16
      %1086 = vsyncadd [#allocation9], %s1085
      %s1088 = sshll.u32 [#allocation8], 4
      %s1089 = int_to_ptr.vmem [resolvable:$true] %s1088
      %1091 = dma.vmem_to_hbm [thread:$0]  %s1089, 16, %s4, [#allocation9]
    $region29: #{tpu_custom_call.1} parent=1 // pred_fallthru
      _
    // Predicated region
    $region30: #{tpu_custom_call.1} parent=1 // pred_check
      _
    $region31: #{tpu_custom_call.1} parent=1 // pred_check_branch
      %1093 = sbr.rel (0) target = $region33
    $region32: #{tpu_custom_call.1} parent=1 // pred_region
      %s1095 = ssub.s32 16, 16
      %1096 = vsyncadd [#allocation9], %s1095
      %s1098 = sshll.u32 [#allocation10], 4
      %s1099 = int_to_ptr.vmem [resolvable:$true] %s1098
      %1101 = dma.vmem_to_hbm [thread:$0]  %s1099, 16, %s5, [#allocation9]
    $region33: #{tpu_custom_call.1} parent=1 // pred_fallthru
      _
    // Predicated region
    $region34: #{tpu_custom_call.1} parent=1 // pred_check
      _
    $region35: #{tpu_custom_call.1} parent=1 // pred_check_branch
      %1103 = sbr.rel (0) target = $region37
    $region36: #{tpu_custom_call.1} parent=1 // pred_region
      %s1105 = ssub.s32 16, 16
      %1106 = vsyncadd [#allocation12], %s1105
      %s1108 = sshll.u32 [#allocation11], 4
      %s1109 = int_to_ptr.vmem [resolvable:$true] %s1108
      %1111 = dma.vmem_to_hbm [thread:$0]  %s1109, 16, %s6, [#allocation12]
    $region37: #{tpu_custom_call.1} parent=1 // pred_fallthru
      _
    // Predicated region
    $region38: #{tpu_custom_call.1} parent=1 // pred_check
      _
    $region39: #{tpu_custom_call.1} parent=1 // pred_check_branch
      %1113 = sbr.rel (0) target = $region41
    $region40: #{tpu_custom_call.1} parent=1 // pred_region
      %1114 = dma.done [#allocation4], 2048
    $region41: #{tpu_custom_call.1} parent=1 // pred_fallthru
      _
    // Predicated region
    $region42: #{tpu_custom_call.1} parent=1 // pred_check
      _
    $region43: #{tpu_custom_call.1} parent=1 // pred_check_branch
      %1116 = sbr.rel (0) target = $region45
    $region44: #{tpu_custom_call.1} parent=1 // pred_region
      %1117 = dma.done [#allocation9], 16
    $region45: #{tpu_custom_call.1} parent=1 // pred_fallthru
      _
    // Predicated region
    $region46: #{tpu_custom_call.1} parent=1 // pred_check
      _
    $region47: #{tpu_custom_call.1} parent=1 // pred_check_branch
      %1119 = sbr.rel (0) target = $region49
    $region48: #{tpu_custom_call.1} parent=1 // pred_region
      %1120 = dma.done [#allocation9], 16
    $region49: #{tpu_custom_call.1} parent=1 // pred_fallthru
      _
    // Predicated region
    $region50: #{tpu_custom_call.1} parent=1 // pred_check
      _
    $region51: #{tpu_custom_call.1} parent=1 // pred_check_branch
      %1122 = sbr.rel (0) target = $region53
    $region52: #{tpu_custom_call.1} parent=1 // pred_region
      %1123 = dma.done [#allocation12], 16
    $region53: #{tpu_custom_call.1} parent=1 // pred_fallthru
      _
    %1124 = vsyncpa [#allocation3], 1
    %1125 = vsyncpa [#allocation6], 1
    %1126 = vsyncpa [#allocation4], 1
    %1127 = vsyncpa [#allocation9], 1
    %1128 = vsyncpa [#allocation12], 1

</llo_original>
